<compile_context>
chip_gen: v5e
topology: v5e:2x2
jax: 0.10.0
libtpu: 0.0.40
codegen_flags: <defaults>
</compile_context>

<pallas_src>
import functools
import math

import jax
import jax.numpy as jnp
from jax.experimental import pallas as pl
from jax.experimental.pallas import tpu as pltpu


@functools.lru_cache(maxsize=1)
def _vmem_limit_bytes():
    """~80% of the per-core VMEM capacity (generation-aware), with a fallback."""
    cap = 128 * 1024 * 1024
    try:
        info = pltpu.get_tpu_info()
        cap = int(getattr(info, "vmem_capacity_bytes", cap))
    except Exception:
        pass
    return max(32 * 1024 * 1024, int(cap * 0.8))


def _pick_tile(n, candidates=(512, 256, 128)):
    """Largest tile in `candidates` dividing n, else the full extent."""
    for c in candidates:
        if n % c == 0:
            return c
    return n


# ----------------------------------------------------------------------------
# Fused / tiled linear projection:  out[s] = x @ W_s^T + b_s  for s in [0, S)
# bf16 MXU inputs, f32 accumulation over a K (D_in) grid axis.
# ----------------------------------------------------------------------------

def _proj_kernel(x_ref, w_ref, b_ref, o_ref, acc_ref):
    # x: (tm, tk); w: (1, tk, tn) bf16; b: (1, 1, tn) f32
    # o: (1, tm, tn); acc: (tm, tn) f32 resident across the K axis.
    kk = pl.program_id(3)

    @pl.when(kk == 0)
    def _():
        acc_ref[...] = jnp.zeros_like(acc_ref)

    acc_ref[...] += jnp.dot(
        x_ref[...].astype(jnp.bfloat16),           # bf16 MXU input (no-op if bf16)
        w_ref[0],                                  # weights stored bf16
        preferred_element_type=jnp.float32)

    @pl.when(kk == pl.num_programs(3) - 1)
    def _():
        o_ref[0] = (acc_ref[...] + b_ref[0]).astype(o_ref.dtype)


def _proj(x, w_t_stack, b_stack, out_dtype):
    """x: (M, D_in); w_t_stack: (S, D_in, D_out) bf16; b_stack: (S, 1, D_out) f32
    -> (S, M, D_out) in `out_dtype`.

    One pallas_call computes all S projections of the same input (fused QKV
    when S == 3), tiled over M, D_out and D_in (accumulated in f32 scratch)."""
    M, D_in = x.shape
    S, _, D_out = w_t_stack.shape
    tm = _pick_tile(M)
    tn = _pick_tile(D_out)
    tk = _pick_tile(D_in)
    grid = (M // tm, D_out // tn, S, D_in // tk)
    return pl.pallas_call(
        _proj_kernel,
        out_shape=jax.ShapeDtypeStruct((S, M, D_out), out_dtype),
        grid=grid,
        in_specs=[
            pl.BlockSpec((tm, tk), lambda i, j, p, kk: (i, kk)),
            pl.BlockSpec((1, tk, tn), lambda i, j, p, kk: (p, kk, j)),
            pl.BlockSpec((1, 1, tn), lambda i, j, p, kk: (p, 0, j)),
        ],
        out_specs=pl.BlockSpec((1, tm, tn), lambda i, j, p, kk: (p, i, j)),
        scratch_shapes=[pltpu.VMEM((tm, tn), jnp.float32)],
        compiler_params=pltpu.CompilerParams(
            dimension_semantics=("parallel", "parallel", "arbitrary", "arbitrary"),
            vmem_limit_bytes=_vmem_limit_bytes(),
        ),
    )(x, w_t_stack, b_stack)


# ----------------------------------------------------------------------------
# Attention: per (batch, q-tile) block, all heads handled in-kernel.
# ----------------------------------------------------------------------------

def _attn_core(q_ref, k_ref, v_ref, m_ref, o_ref, s_ref, acc_ref,
               *, h, dk, mask_heads):
    # q: (1, TQ, D) bf16; k, v: (1, Lk, D) bf16
    # m: (1, mask_heads, TQ, Lk) int8 (0 == masked out) or None
    # o: (1, TQ, D) bf16; s: (1, TQ, Lk) f32; acc: (TQ, D) f32 scratch
    TQ = q_ref.shape[1]
    Lk = k_ref.shape[1]
    q = q_ref[0]          # (TQ, D); 1/sqrt(d_k) already folded into W_q
    k = k_ref[0]          # (Lk, D)
    v = v_ref[0]          # (Lk, D)

    neg = jnp.float32(-1e30)
    zero = jnp.float32(0.0)
    shared_bias = None
    if m_ref is not None and mask_heads == 1:
        # Head-invariant mask: convert once, reuse across the head loop.
        shared_bias = jnp.where(m_ref[0, 0] == 0, neg, zero)        # (TQ, Lk)

    avg = jnp.zeros((TQ, Lk), jnp.float32)
    for hd in range(h):                       # static unroll over heads
        lo = hd * dk
        qh = q[:, lo:lo + dk]                 # (TQ, dk) bf16, contiguous chunk
        kh = k[:, lo:lo + dk]                 # (Lk, dk) bf16
        vh = v[:, lo:lo + dk]                 # (Lk, dk) bf16
        # scores = qh @ kh^T : bf16 MXU inputs, f32 accumulation
        s = jax.lax.dot_general(qh, kh, (((1,), (1,)), ((), ())),
                                preferred_element_type=jnp.float32)  # (TQ, Lk)
        if m_ref is not None:
            if mask_heads == 1:
                s = s + shared_bias
            else:
                s = s + jnp.where(m_ref[0, hd] == 0, neg, zero)
        mx = jnp.max(s, axis=-1, keepdims=True)
        e = jnp.exp(s - mx)
        inv = pl.reciprocal(jnp.sum(e, axis=-1, keepdims=True), approx=True)
        p = e * inv                           # softmax probabilities (f32)
        # NOTE: nn.Dropout(p_drop) on the probabilities is identity at inference.
        avg = avg + p
        # Per-head PV result directly into the resident f32 accumulator slice
        # (heads concatenated along features == detach_batch layout).
        acc_ref[:, lo:lo + dk] = jnp.dot(p.astype(jnp.bfloat16), vh,
                                         preferred_element_type=jnp.float32)

    o_ref[0] = acc_ref[...].astype(o_ref.dtype)       # one lane-dense full store
    s_ref[0] = (avg * (1.0 / h)).astype(s_ref.dtype)


def _attn_kernel(q_ref, k_ref, v_ref, o_ref, s_ref, acc_ref, *, h, dk):
    _attn_core(q_ref, k_ref, v_ref, None, o_ref, s_ref, acc_ref,
               h=h, dk=dk, mask_heads=1)


def _attn_kernel_masked(q_ref, k_ref, v_ref, m_ref, o_ref, s_ref, acc_ref,
                        *, h, dk, mask_heads):
    _attn_core(q_ref, k_ref, v_ref, m_ref, o_ref, s_ref, acc_ref,
               h=h, dk=dk, mask_heads=mask_heads)


def _attention(qp, kp, vp, mask_i8, mask_heads, h, dk):
    """qp: (B, Lq, D) bf16; kp, vp: (B, Lk, D) bf16;
    mask_i8: (B, mask_heads, Lq, Lk) int8 or None.
    Returns attn_out (B, Lq, D) bf16 (detach_batch layout) and the
    head-averaged attention probabilities (B, Lq, Lk) f32."""
    B, Lq, D = qp.shape
    Lk = kp.shape[1]
    tq = _pick_tile(Lq, (256, 128))
    if B * (Lq // tq) < 2:
        # v7x megacore: make sure both TensorCores get at least one block.
        for c in (128, 64, 32):   # multiples of 32 keep int8 mask tiles aligned
            if Lq % c == 0 and Lq // c >= 2:
                tq = c
                break
    grid = (B, Lq // tq)

    in_specs = [
        pl.BlockSpec((1, tq, D), lambda b, qi: (b, qi, 0)),
        pl.BlockSpec((1, Lk, D), lambda b, qi: (b, 0, 0)),
        pl.BlockSpec((1, Lk, D), lambda b, qi: (b, 0, 0)),
    ]
    args = [qp, kp, vp]
    if mask_i8 is None:
        kernel = functools.partial(_attn_kernel, h=h, dk=dk)
    else:
        kernel = functools.partial(_attn_kernel_masked, h=h, dk=dk,
                                   mask_heads=mask_heads)
        in_specs.append(
            pl.BlockSpec((1, mask_heads, tq, Lk), lambda b, qi: (b, 0, qi, 0)))
        args.append(mask_i8)

    return pl.pallas_call(
        kernel,
        out_shape=(
            jax.ShapeDtypeStruct((B, Lq, D), qp.dtype),        # bf16 attn out
            jax.ShapeDtypeStruct((B, Lq, Lk), jnp.float32),    # avg attn score
        ),
        grid=grid,
        in_specs=in_specs,
        out_specs=(
            pl.BlockSpec((1, tq, D), lambda b, qi: (b, qi, 0)),
            pl.BlockSpec((1, tq, Lk), lambda b, qi: (b, qi, 0)),
        ),
        scratch_shapes=[pltpu.VMEM((tq, D), jnp.float32)],
        compiler_params=pltpu.CompilerParams(
            dimension_semantics=("parallel", "parallel"),
            vmem_limit_bytes=_vmem_limit_bytes(),
        ),
    )(*args)


def _normalize_mask(mask, B, h, Lq, Lk):
    """Accepts (Lq,Lk), (B|1, Lq, Lk), (B*h, Lq, Lk) or (B|1, 1|h, Lq, Lk).
    Returns an int8 (B, Hm, Lq, Lk) mask with Hm in {1, h} (0 == masked out)."""
    m = jnp.asarray(mask)
    if m.ndim == 2:
        m = m[None, None]
    elif m.ndim == 3:
        if h > 1 and m.shape[0] == B * h:
            m = m.reshape(B, h, Lq, Lk)
        else:
            m = m[:, None]
    assert m.ndim == 4, "mask must be 2D/3D/4D"
    Hm = m.shape[1]
    assert Hm in (1, h), "mask head dim must be 1 or h"
    m = jnp.broadcast_to(m, (B, Hm, Lq, Lk))
    return (m != 0).astype(jnp.int8), Hm


# ----------------------------------------------------------------------------
# Module wrapper (parameter setup / reshapes = glue; hot path = Pallas kernels)
# ----------------------------------------------------------------------------

class MultiHeadAttentionPallas:
    def __init__(self, d_model: int, h: int, p_drop: float, key):
        assert d_model % h == 0
        self.d_model = d_model
        self.h = h
        self.d_k = d_model // h
        self.p_drop = p_drop  # dropout is identity at inference

        k_qkv, k_concat = jax.random.split(key)
        # _reset_parameters: xavier_uniform on a (3*d_model, d_model) tensor,
        # chunked into fc_q / fc_k / fc_v weights; all q/k/v biases zero.
        fan_in, fan_out = d_model, 3 * d_model
        bound = math.sqrt(6.0 / (fan_in + fan_out))
        concat_w = jax.random.uniform(
            k_qkv, (3 * d_model, d_model), jnp.float32, -bound, bound)
        wq, wk, wv = jnp.split(concat_w, 3, axis=0)   # each (d_model, d_model)
        scale = 1.0 / math.sqrt(self.d_k)
        # nn.Linear does x @ W^T -> store transposed (D_in, D_out) weights in
        # bf16 (MXU-native).  Fold the 1/sqrt(d_k) attention scale into W_q
        # (its bias is zero).
        self.w_qkv_t = jnp.stack([wq.T * scale, wk.T, wv.T]).astype(jnp.bfloat16)
        self.b_qkv = jnp.zeros((3, 1, d_model), jnp.float32)

        # fc_concat: default nn.Linear weight init; bias zeroed by _reset_parameters.
        cb = 1.0 / math.sqrt(d_model)
        wc = jax.random.uniform(k_concat, (d_model, d_model), jnp.float32, -cb, cb)
        self.wc_t = wc.T[None].astype(jnp.bfloat16)   # (1, D, D)
        self.bc = jnp.zeros((1, 1, d_model), jnp.float32)

    def __call__(self, q, k, v, mask=None):
        """
        q: (B, Lq, d_model); k, v: (B, Lk, d_model)
        mask: broadcastable to (B, h, Lq, Lk) (or (B*h, Lq, Lk)); 0 == masked out
        returns: out (B, Lq, d_model) f32, avg_attn_score (B, Lq, Lk) f32
        """
        B, Lq, D = q.shape
        Lk = k.shape[1]
        bf = jnp.bfloat16

        # ---- projections (fused when inputs are shared by object identity) ----
        if q is k and k is v:
            qkv = _proj(q.reshape(B * Lq, D), self.w_qkv_t, self.b_qkv, bf)
            qp = qkv[0].reshape(B, Lq, D)
            kp = qkv[1].reshape(B, Lk, D)
            vp = qkv[2].reshape(B, Lk, D)
        elif k is v:
            qp = _proj(q.reshape(B * Lq, D),
                       self.w_qkv_t[0:1], self.b_qkv[0:1], bf)[0].reshape(B, Lq, D)
            kv = _proj(k.reshape(B * Lk, D),
                       self.w_qkv_t[1:3], self.b_qkv[1:3], bf)
            kp = kv[0].reshape(B, Lk, D)
            vp = kv[1].reshape(B, Lk, D)
        else:
            qp = _proj(q.reshape(B * Lq, D),
                       self.w_qkv_t[0:1], self.b_qkv[0:1], bf)[0].reshape(B, Lq, D)
            kp = _proj(k.reshape(B * Lk, D),
                       self.w_qkv_t[1:2], self.b_qkv[1:2], bf)[0].reshape(B, Lk, D)
            vp = _proj(v.reshape(B * Lk, D),
                       self.w_qkv_t[2:3], self.b_qkv[2:3], bf)[0].reshape(B, Lk, D)

        # ---- compact int8 mask (converted to -1e30 additive bias in-kernel) ----
        mask_i8, mask_heads = None, 1
        if mask is not None:
            mask_i8, mask_heads = _normalize_mask(mask, B, self.h, Lq, Lk)

        # ---- attention (heads sliced in-kernel; avg score computed in-kernel) ----
        attn_out, avg_score = _attention(qp, kp, vp, mask_i8, mask_heads,
                                         self.h, self.d_k)

        # ---- output projection (bf16 in, f32 out) ----
        out = _proj(attn_out.reshape(B * Lq, D),
                    self.wc_t, self.bc, jnp.float32)[0].reshape(B, Lq, D)
        return out, avg_score


# ----------------------------------------------------------------------------
# Pure-JAX reference (mirrors the PyTorch forward, with the same bf16-MXU /
# f32-accumulate rounding points as the kernels) for a sanity check.
# ----------------------------------------------------------------------------

def _ref_forward(mha, q, k, v, mask):
    B, Lq, D = q.shape
    Lk = k.shape[1]
    h, dk = mha.h, mha.d_k
    hp = jax.lax.Precision.HIGHEST
    bf = jnp.bfloat16
    f32 = jnp.float32

    def proj(x, wt, b):
        xb = x.reshape(-1, D).astype(bf).astype(f32)
        return jnp.dot(xb, wt.astype(f32), precision=hp) + b

    qp = proj(q, mha.w_qkv_t[0], mha.b_qkv[0]).astype(bf)   # kernels emit bf16
    kp = proj(k, mha.w_qkv_t[1], mha.b_qkv[1]).astype(bf)
    vp = proj(v, mha.w_qkv_t[2], mha.b_qkv[2]).astype(bf)
    qh = qp.reshape(B, Lq, h, dk).transpose(0, 2, 1, 3).reshape(B * h, Lq, dk)
    kh = kp.reshape(B, Lk, h, dk).transpose(0, 2, 1, 3).reshape(B * h, Lk, dk)
    vh = vp.reshape(B, Lk, h, dk).transpose(0, 2, 1, 3).reshape(B * h, Lk, dk)
    s = jnp.einsum('bqd,bkd->bqk', qh.astype(f32), kh.astype(f32), precision=hp)
    if mask is not None:
        m = jnp.asarray(mask)
        if m.ndim == 2:
            m = m[None, None]
        elif m.ndim == 3:
            m = m.reshape(B, h, Lq, Lk) if (h > 1 and m.shape[0] == B * h) else m[:, None]
        m = jnp.broadcast_to(m, (B, h, Lq, Lk)).reshape(B * h, Lq, Lk)
        s = jnp.where(m == 0, -jnp.inf, s)
    p = jax.nn.softmax(s, axis=-1)
    pv = jnp.einsum('bqk,bkd->bqd', p.astype(bf).astype(f32), vh.astype(f32),
                    precision=hp)
    o = pv.reshape(B, h, Lq, dk).transpose(0, 2, 1, 3).reshape(B, Lq, D).astype(bf)
    out = (jnp.dot(o.reshape(-1, D).astype(f32), mha.wc_t[0].astype(f32),
                   precision=hp) + mha.bc[0]).reshape(B, Lq, D)
    return out, p.reshape(B, h, Lq, Lk).mean(axis=1)


if __name__ == "__main__":
    d_model, h, p_drop = 32, 4, 0.1
    B, Lq, Lk = 2, 8, 8

    key = jax.random.PRNGKey(0)
    k_param, k_q, k_k, k_v = jax.random.split(key, 4)

    mha = MultiHeadAttentionPallas(d_model, h, p_drop, k_param)

    q = jax.random.normal(k_q, (B, Lq, d_model), jnp.float32)
    k = jax.random.normal(k_k, (B, Lk, d_model), jnp.float32)
    v = jax.random.normal(k_v, (B, Lk, d_model), jnp.float32)

    # 1) self-attention (fused QKV projection path), no mask
    out_sa, score_sa = mha(q, q, q, mask=None)
    jax.block_until_ready((out_sa, score_sa))
    assert out_sa.shape == (B, Lq, d_model)
    assert score_sa.shape == (B, Lq, Lk)
    ref_out, ref_score = _ref_forward(mha, q, q, q, None)
    assert jnp.allclose(out_sa, ref_out, atol=2e-2, rtol=2e-2)
    assert jnp.allclose(score_sa, ref_score, atol=2e-2, rtol=2e-2)

    # 2) cross-attention with shared k/v (fused KV projection path)
    out_kv, score_kv = mha(q, k, k, mask=None)
    jax.block_until_ready((out_kv, score_kv))
    ref_out_kv, ref_score_kv = _ref_forward(mha, q, k, k, None)
    assert jnp.allclose(out_kv, ref_out_kv, atol=2e-2, rtol=2e-2)
    assert jnp.allclose(score_kv, ref_score_kv, atol=2e-2, rtol=2e-2)

    # 3) general path, head-invariant causal mask given as (B, 1, Lq, Lk)
    causal = jnp.tril(jnp.ones((Lq, Lk), jnp.float32))
    mask_hi = jnp.broadcast_to(causal, (B, 1, Lq, Lk))
    out_m, score_m = mha(q, k, v, mask=mask_hi)
    jax.block_until_ready((out_m, score_m))
    ref_out_m, ref_score_m = _ref_forward(mha, q, k, v, mask_hi)
    assert jnp.allclose(out_m, ref_out_m, atol=2e-2, rtol=2e-2)
    assert jnp.allclose(score_m, ref_score_m, atol=2e-2, rtol=2e-2)

    # 4) per-head mask given as (B*h, Lq, Lk) (torch calculate_attn layout)
    mask_bh = jnp.broadcast_to(causal, (B * h, Lq, Lk))
    out_m2, score_m2 = mha(q, k, v, mask=mask_bh)
    jax.block_until_ready((out_m2, score_m2))
    assert jnp.allclose(out_m2, ref_out_m, atol=2e-2, rtol=2e-2)
    assert jnp.allclose(score_m2, ref_score_m, atol=2e-2, rtol=2e-2)

    print("KERNEL_OK")
</pallas_src>

<mosaic_0001>
module attributes {stable_mosaic.version = 11 : i64} {
  func.func @_proj_kernel(%arg0: i32, %arg1: i32, %arg2: i32, %arg3: i32, %arg4: memref<16x32xf32, #tpu.memory_space<vmem>>, %arg5: memref<1x32x32xbf16, #tpu.memory_space<vmem>>, %arg6: memref<1x1x32xf32, #tpu.memory_space<vmem>>, %arg7: memref<1x16x32xbf16, #tpu.memory_space<vmem>>, %arg8: memref<16x32xf32, #tpu.memory_space<vmem>>) attributes {dimension_semantics = [#tpu.dimension_semantics<parallel>, #tpu.dimension_semantics<parallel>, #tpu.dimension_semantics<arbitrary>, #tpu.dimension_semantics<arbitrary>], iteration_bounds = array<i64: 1, 1, 3, 1>, scalar_prefetch = 0 : i64, scratch_operands = 1 : i64, tpu.core_type = #tpu.core_type<tc>, window_params = [{transform_indices = @transform_0, window_bounds = array<i64: 16, 32>}, {transform_indices = @transform_1, window_bounds = array<i64: 1, 32, 32>}, {transform_indices = @transform_2, window_bounds = array<i64: 1, 1, 32>}, {transform_indices = @transform_3, window_bounds = array<i64: 1, 16, 32>}]} {
    %c0_i32 = arith.constant 0 : i32
    %0 = arith.cmpi eq, %arg3, %c0_i32 : i32
    %1 = arith.extui %0 : i1 to i32
    %c0_i32_0 = arith.constant 0 : i32
    %2 = arith.cmpi ne, %1, %c0_i32_0 : i32
    scf.if %2 {
      %cst_11 = arith.constant 0.000000e+00 : f32
      %14 = vector.broadcast %cst_11 : f32 to vector<16x32xf32>
      %c0_12 = arith.constant 0 : index
      %c0_13 = arith.constant 0 : index
      %15 = vector.load %arg8[%c0_12, %c0_13] : memref<16x32xf32, #tpu.memory_space<vmem>>, vector<16x32xf32>
      tpu.vector_store %arg8[%c0_12, %c0_13], %14 {strides = array<i32>} : memref<16x32xf32, #tpu.memory_space<vmem>>, vector<16x32xf32>,
    } else {
    }
    %c0 = arith.constant 0 : index
    %c0_1 = arith.constant 0 : index
    %3 = vector.load %arg8[%c0, %c0_1] : memref<16x32xf32, #tpu.memory_space<vmem>>, vector<16x32xf32>
    %c0_2 = arith.constant 0 : index
    %c0_3 = arith.constant 0 : index
    %4 = vector.load %arg4[%c0_2, %c0_3] : memref<16x32xf32, #tpu.memory_space<vmem>>, vector<16x32xf32>
    %5 = arith.truncf %4 : vector<16x32xf32> to vector<16x32xbf16>
    %c0_4 = arith.constant 0 : index
    %c0_5 = arith.constant 0 : index
    %c0_6 = arith.constant 0 : index
    %6 = vector.load %arg5[%c0_4, %c0_5, %c0_6] : memref<1x32x32xbf16, #tpu.memory_space<vmem>>, vector<1x32x32xbf16>
    %7 = vector.shape_cast %6 : vector<1x32x32xbf16> to vector<32x32xbf16>
    %cst = arith.constant dense<0.000000e+00> : vector<16x32xf32>
    %8 = tpu.matmul %5, %7, %cst {dimension_numbers = #tpu.dot_dimension_numbers<[1], [0], [0], [1], [0, 0, 1, 1], [], []>} : vector<16x32xbf16>, vector<32x32xbf16>, vector<16x32xf32> -> vector<16x32xf32>
    %9 = arith.addf %3, %8 : vector<16x32xf32>
    %c0_7 = arith.constant 0 : index
    %c0_8 = arith.constant 0 : index
    %10 = vector.load %arg8[%c0_7, %c0_8] : memref<16x32xf32, #tpu.memory_space<vmem>>, vector<16x32xf32>
    tpu.vector_store %arg8[%c0_7, %c0_8], %9 {strides = array<i32>} : memref<16x32xf32, #tpu.memory_space<vmem>>, vector<16x32xf32>,
    %c0_i32_9 = arith.constant 0 : i32
    %11 = arith.cmpi eq, %arg3, %c0_i32_9 : i32
    %12 = arith.extui %11 : i1 to i32
    %c0_i32_10 = arith.constant 0 : i32
    %13 = arith.cmpi ne, %12, %c0_i32_10 : i32
    scf.if %13 {
      %c0_11 = arith.constant 0 : index
      %c0_12 = arith.constant 0 : index
      %14 = vector.load %arg8[%c0_11, %c0_12] : memref<16x32xf32, #tpu.memory_space<vmem>>, vector<16x32xf32>
      %c0_13 = arith.constant 0 : index
      %c0_14 = arith.constant 0 : index
      %c0_15 = arith.constant 0 : index
      %15 = vector.load %arg6[%c0_13, %c0_14, %c0_15] : memref<1x1x32xf32, #tpu.memory_space<vmem>>, vector<1x1x32xf32>
      %16 = vector.shape_cast %15 : vector<1x1x32xf32> to vector<1x32xf32>
      %17 = vector.broadcast %16 : vector<1x32xf32> to vector<16x32xf32>
      %18 = arith.addf %14, %17 : vector<16x32xf32>
      %19 = arith.truncf %18 : vector<16x32xf32> to vector<16x32xbf16>
      %c0_16 = arith.constant 0 : index
      %c0_17 = arith.constant 0 : index
      %c0_18 = arith.constant 0 : index
      %20 = vector.load %arg7[%c0_16, %c0_17, %c0_18] : memref<1x16x32xbf16, #tpu.memory_space<vmem>>, vector<1x16x32xbf16>
      %21 = vector.shape_cast %20 : vector<1x16x32xbf16> to vector<16x32xbf16>
      %22 = vector.shape_cast %19 : vector<16x32xbf16> to vector<1x16x32xbf16>
      tpu.vector_store %arg7[%c0_16, %c0_17, %c0_18], %22 {strides = array<i32>} : memref<1x16x32xbf16, #tpu.memory_space<vmem>>, vector<1x16x32xbf16>,
    } else {
    }
    return
  }
  func.func @transform_0(%arg0: i32, %arg1: i32, %arg2: i32, %arg3: i32) -> (i32, i32) {
    %c0_i32 = arith.constant 0 : i32
    return %arg0, %arg3 : i32, i32
  }
  func.func @transform_1(%arg0: i32, %arg1: i32, %arg2: i32, %arg3: i32) -> (i32, i32, i32) {
    %c0_i32 = arith.constant 0 : i32
    return %arg2, %arg3, %arg1 : i32, i32, i32
  }
  func.func @transform_2(%arg0: i32, %arg1: i32, %arg2: i32, %arg3: i32) -> (i32, i32, i32) {
    %c0_i32 = arith.constant 0 : i32
    %c0_i32_0 = arith.constant 0 : i32
    return %arg2, %c0_i32, %arg1 : i32, i32, i32
  }
  func.func @transform_3(%arg0: i32, %arg1: i32, %arg2: i32, %arg3: i32) -> (i32, i32, i32) {
    %c0_i32 = arith.constant 0 : i32
    return %arg2, %arg0, %arg1 : i32, i32, i32
  }
}

</mosaic_0001>

<llo_original>
// kernel: tpu_custom_call.1
$region0: #{tpu_custom_call.1}
  #allocation0 [shape = 'u32[]', space=smem, size = 0x4, offset = 0x4, fixed_abs, tag = 'smem constant byte address 0x4 - core index']
  #allocation1 [shape = 'u32[72,128]{1,0:T(1,128)}', space=vmem, size = 0x9000, scoped, tag = 'internal scratch']
  #allocation2 [shape = 'f32[16,32]{1,0:T(8,128)}', space=vmem, size = 0x2000, scoped, tag = 'scratch operand']
  %s0 = inlined_call_operand.hbm [shape: f32[16,32], index: 0, kind: input, shape index: {}]
  %s1 = inlined_call_operand.hbm [shape: bf16[3,32,32], index: 1, kind: input, shape index: {}]
  %s2 = inlined_call_operand.hbm [shape: f32[3,1,32], index: 2, kind: input, shape index: {}]
  %s3 = inlined_call_operand.hbm [shape: bf16[3,16,32], index: 3, kind: output, shape index: {}]
  %s4 = sld [smem:[#allocation0]]
  $region65: #{tpu_custom_call.1} parent=0
    _
  %s6 = ssub.s32 1, %s4
  %s7 = scalar_select 0, %s6, %s4
  $region1: #{tpu_custom_call.1} parent=0
    #allocation3 [shape = 'u8[8192]{0}', space=vmem, size = 0x2000, scoped, tag = 'input window, operand 0, single buffered']
    #allocation4 [shape = 's32[2]{0}', space=sflag, size = 0x8, scoped, tag = 'scoped memory for tpu_custom_call.1']
    #allocation5 [shape = 's32[2]{0}', space=sflag, size = 0x8, scoped, tag = 'scoped memory for tpu_custom_call.1']
    #allocation6 [shape = 'u8[16384]{0}', space=vmem, size = 0x4000, scoped, tag = 'input window, operand 1']
    #allocation7 [shape = 's32[2]{0}', space=sflag, size = 0x8, scoped, tag = 'scoped memory for tpu_custom_call.1']
    #allocation8 [shape = 'u8[1024]{0}', space=vmem, size = 0x400, scoped, tag = 'input window, operand 2']
    #allocation9 [shape = 'u8[8192]{0}', space=vmem, size = 0x2000, scoped, tag = 'output window, operand 0']
    %8 = vsyncpa [#allocation4], 0
    %9 = vsyncpa [#allocation7], 0
    %s10 = scalar_lea.sflag [#allocation7], 1
    %11 = vsyncpa %s10, 0
    %12 = vsyncpa [#allocation5], 0
    %s13 = scalar_lea.sflag [#allocation5], 1
    %14 = vsyncpa %s13, 0
    loop: start=0, step=1, limit=5
    $region2: #{tpu_custom_call.1} parent=1 // loop_pre_header
      _
    $region3: #{tpu_custom_call.1} parent=1 // loop_header
      %s16 = sphi 0, %s20
      %p17 = scmp.ge.s32.totalorder %s16, 5
      %s23 = sphi 0, %s49
      %s24 = sphi 0, %s45
      %s25 = sphi 0, %s41
      %s26 = sphi 0, %s37
      %s27 = sphi 0, %s23
      %s28 = sphi 0, %s24
      %s29 = sphi 0, %s25
      %s30 = sphi 0, %s26
      %s31 = sphi 0, %s27
      %s32 = sphi 0, %s28
      %s33 = sphi 0, %s29
      %s34 = sphi 0, %s30
      %s54 = sphi 0, %s56
      %s57 = sphi 0, %s54
      %s58 = sphi 0, %s57
      %s74 = sphi 0, %s58
      %s84 = sphi 0, %s86
      %s87 = sphi 0, %s84
      %s88 = sphi 0, %s87
      %s104 = sphi 0, %s88
      %s112 = sphi 0, %s114
      %s115 = sphi 0, %s112
      %s116 = sphi 0, %s115
      %s132 = sphi 0, %s116
      %s142 = sphi 0, %s144
      %s145 = sphi 0, %s142
      %s146 = sphi 0, %s145
      %s162 = sphi 0, %s146
    $region4: #{tpu_custom_call.1} parent=1 // loop_header_branch
      %19 = sbr.rel (%p17) target = $region8
    $region5: #{tpu_custom_call.1} parent=1 // loop_body
      %s21 = ssub.s32 %s16, 1
      %s22 = ssub.s32 %s16, 2
      %s35 = sadd.s32 1, %s26
      %p36 = scmp.ge.s32.totalorder %s35, 1
      %s37 = scalar_select %p36, 0, %s35
      %s38 = sadd.s32 1, %s25
      %s39 = scalar_select %p36, %s38, %s25
      %p40 = scmp.ge.s32.totalorder %s39, 3
      %s41 = scalar_select %p40, 0, %s39
      %s42 = sadd.s32 1, %s24
      %s43 = scalar_select %p40, %s42, %s24
      %p44 = scmp.ge.s32.totalorder %s43, 1
      %s45 = scalar_select %p44, 0, %s43
      %s46 = sadd.s32 1, %s23
      %s47 = scalar_select %p44, %s46, %s23
      %p48 = scmp.ge.s32.totalorder %s47, 1
      %s49 = scalar_select %p48, 0, %s47
      %s50 = ssub.s32 %s23, %s49
      %s51 = ssub.s32 %s26, %s37
      %s52 = sor.u32 %s50, %s51
      %p53 = scmp.eq.s32.totalorder %s52, 0
      %s55 = sadd.s32 %s54, 1
      %s56 = scalar_select %p53, %s54, %s55
      %p59 = pneg %p53
      %p60 = scmp.eq.s32.totalorder %s16, 2
      %p61 = por %p59, %p60
      %p62 = scmp.ne.s32.totalorder %s54, %s57
      %p63 = scmp.eq.s32.totalorder %s16, 0
      %p64 = por %p62, %p63
      %p65 = scmp.ne.s32.totalorder %s54, %s57
      %p66 = scmp.eq.s32.totalorder %s21, 2
      %p67 = por %p65, %p66
      %p68 = scmp.ne.s32.totalorder %s57, %s58
      %p69 = scmp.eq.s32.totalorder %s21, 0
      %p70 = por %p68, %p69
      %p71 = scmp.ne.s32.totalorder %s57, %s58
      %p72 = scmp.eq.s32.totalorder %s22, 2
      %p73 = por %p71, %p72
      %p75 = scmp.ne.s32.totalorder %s58, %s74
      %p76 = scmp.eq.s32.totalorder %s22, 0
      %p77 = por %p75, %p76
      %s78 = ssub.s32 %s25, %s41
      %s79 = ssub.s32 %s26, %s37
      %s80 = sor.u32 %s78, %s79
      %s81 = ssub.s32 %s24, %s45
      %s82 = sor.u32 %s80, %s81
      %p83 = scmp.eq.s32.totalorder %s82, 0
      %s85 = sadd.s32 %s84, 1
      %s86 = scalar_select %p83, %s84, %s85
      %p89 = pneg %p83
      %p90 = scmp.eq.s32.totalorder %s16, 2
      %p91 = por %p89, %p90
      %p92 = scmp.ne.s32.totalorder %s84, %s87
      %p93 = scmp.eq.s32.totalorder %s16, 0
      %p94 = por %p92, %p93
      %p95 = scmp.ne.s32.totalorder %s84, %s87
      %p96 = scmp.eq.s32.totalorder %s21, 2
      %p97 = por %p95, %p96
      %p98 = scmp.ne.s32.totalorder %s87, %s88
      %p99 = scmp.eq.s32.totalorder %s21, 0
      %p100 = por %p98, %p99
      %p101 = scmp.ne.s32.totalorder %s87, %s88
      %p102 = scmp.eq.s32.totalorder %s22, 2
      %p103 = por %p101, %p102
      %p105 = scmp.ne.s32.totalorder %s88, %s104
      %p106 = scmp.eq.s32.totalorder %s22, 0
      %p107 = por %p105, %p106
      %s108 = ssub.s32 %s25, %s41
      %s109 = ssub.s32 %s24, %s45
      %s110 = sor.u32 %s108, %s109
      %p111 = scmp.eq.s32.totalorder %s110, 0
      %s113 = sadd.s32 %s112, 1
      %s114 = scalar_select %p111, %s112, %s113
      %p117 = pneg %p111
      %p118 = scmp.eq.s32.totalorder %s16, 2
      %p119 = por %p117, %p118
      %p120 = scmp.ne.s32.totalorder %s112, %s115
      %p121 = scmp.eq.s32.totalorder %s16, 0
      %p122 = por %p120, %p121
      %p123 = scmp.ne.s32.totalorder %s112, %s115
      %p124 = scmp.eq.s32.totalorder %s21, 2
      %p125 = por %p123, %p124
      %p126 = scmp.ne.s32.totalorder %s115, %s116
      %p127 = scmp.eq.s32.totalorder %s21, 0
      %p128 = por %p126, %p127
      %p129 = scmp.ne.s32.totalorder %s115, %s116
      %p130 = scmp.eq.s32.totalorder %s22, 2
      %p131 = por %p129, %p130
      %p133 = scmp.ne.s32.totalorder %s116, %s132
      %p134 = scmp.eq.s32.totalorder %s22, 0
      %p135 = por %p133, %p134
      %s136 = ssub.s32 %s25, %s41
      %s137 = ssub.s32 %s23, %s49
      %s138 = sor.u32 %s136, %s137
      %s139 = ssub.s32 %s24, %s45
      %s140 = sor.u32 %s138, %s139
      %p141 = scmp.eq.s32.totalorder %s140, 0
      %s143 = sadd.s32 %s142, 1
      %s144 = scalar_select %p141, %s142, %s143
      %p147 = pneg %p141
      %p148 = scmp.eq.s32.totalorder %s16, 2
      %p149 = por %p147, %p148
      %p150 = scmp.ne.s32.totalorder %s142, %s145
      %p151 = scmp.eq.s32.totalorder %s16, 0
      %p152 = por %p150, %p151
      %p153 = scmp.ne.s32.totalorder %s142, %s145
      %p154 = scmp.eq.s32.totalorder %s21, 2
      %p155 = por %p153, %p154
      %p156 = scmp.ne.s32.totalorder %s145, %s146
      %p157 = scmp.eq.s32.totalorder %s21, 0
      %p158 = por %p156, %p157
      %p159 = scmp.ne.s32.totalorder %s145, %s146
      %p160 = scmp.eq.s32.totalorder %s22, 2
      %p161 = por %p159, %p160
      %p163 = scmp.ne.s32.totalorder %s146, %s162
      %p164 = scmp.eq.s32.totalorder %s22, 0
      %p165 = por %p163, %p164
      %p166 = scmp.le.s32.totalorder 1, %s16
      %p167 = scmp.lt.s32.totalorder %s16, 4
      %p168 = pnand %p166, %p167
      %p169 = pneg %p168
      // Predicated region
      $region9: #{tpu_custom_call.1} parent=5 // pred_check
        _
      $region10: #{tpu_custom_call.1} parent=5 // pred_check_branch
        %171 = sbr.rel (%p168) target = $region12
      $region11: #{tpu_custom_call.1} parent=5 // pred_region
        %s172 = ssub.s32 %s16, 1
        // Predicated region
        $region13: #{tpu_custom_call.1} parent=11 // pred_check
          %p173 = pneg %p70
        $region14: #{tpu_custom_call.1} parent=11 // pred_check_branch
          %175 = sbr.rel (%p173) target = $region16
        $region15: #{tpu_custom_call.1} parent=11 // pred_region
          %s176 = smul.u32 2, %s27
          %178 = vsyncadd [#allocation4], 0
          %s179 = sadd.s32 %s30, %s176
          %s180 = smul.addr %s179, 8
          %s181 = scalar_lea.hbm %s0, %s180
          %s182 = sshll.u32 %s181, 4
          %s183 = int_to_ptr.hbm [resolvable:$true] %s182
          %s184 = sshll.u32 [#allocation3], 4
          %s185 = int_to_ptr.vmem [resolvable:$true] %s184
          %190 = dma.hbm_to_vmem [thread:$0]  %s183, 256, %s185, [#allocation4], 128, 128, 8
        $region16: #{tpu_custom_call.1} parent=11 // pred_fallthru
          _
      $region12: #{tpu_custom_call.1} parent=5 // pred_fallthru
        _
      %p191 = scmp.lt.s32.totalorder %s16, 3
      // Predicated region
      $region17: #{tpu_custom_call.1} parent=5 // pred_check
        %p192 = pneg %p191
      $region18: #{tpu_custom_call.1} parent=5 // pred_check_branch
        %194 = sbr.rel (%p192) target = $region20
      $region19: #{tpu_custom_call.1} parent=5 // pred_region
        // Predicated region
        $region21: #{tpu_custom_call.1} parent=19 // pred_check
          %p195 = pneg %p94
        $region22: #{tpu_custom_call.1} parent=19 // pred_check_branch
          %197 = sbr.rel (%p195) target = $region24
        $region23: #{tpu_custom_call.1} parent=19 // pred_region
          %s198 = sand.u32 %s16, 1
          %s199 = scalar_lea.sflag [#allocation7], %s198
          %s200 = sand.u32 %s84, 1
          %s201 = smul.addr %s200, 16
          %s202 = scalar_lea.vmem [#allocation6], %s201
          %s203 = smul.u32 4, %s26
          %205 = vsyncadd %s199, 0
          %s206 = sadd.s32 %s24, %s203
          %s207 = smul.addr %s25, 4
          %s208 = sadd.s32 %s206, %s207
          %s209 = smul.addr %s208, 4
          %s210 = scalar_lea.hbm %s1, %s209
          %s211 = sshll.u32 %s210, 4
          %s212 = int_to_ptr.hbm [resolvable:$true] %s211
          %s213 = sshll.u32 %s202, 4
          %s214 = int_to_ptr.vmem [resolvable:$true] %s213
          %219 = dma.hbm_to_vmem [thread:$0]  %s212, 256, %s214, %s199, 64, 64, 4
        $region24: #{tpu_custom_call.1} parent=19 // pred_fallthru
          _
        // Predicated region
        $region25: #{tpu_custom_call.1} parent=19 // pred_check
          %p220 = pneg %p122
        $region26: #{tpu_custom_call.1} parent=19 // pred_check_branch
          %222 = sbr.rel (%p220) target = $region28
        $region27: #{tpu_custom_call.1} parent=19 // pred_region
          %s223 = sand.u32 %s16, 1
          %s224 = scalar_lea.sflag [#allocation7], %s223
          %s225 = sand.u32 %s112, 1
          %s226 = scalar_lea.vmem [#allocation8], %s225
          %228 = vsyncadd %s224, 0
          %s229 = sadd.s32 %s24, %s25
          %s230 = scalar_lea.hbm %s2, %s229
          %s232 = sshll.u32 %s230, 4
          %s233 = int_to_ptr.hbm [resolvable:$true] %s232
          %s234 = sshll.u32 %s226, 4
          %s235 = int_to_ptr.vmem [resolvable:$true] %s234
          %237 = dma.hbm_to_vmem [thread:$0]  %s233, 16, %s235, %s224
        $region28: #{tpu_custom_call.1} parent=19 // pred_fallthru
          _
      $region20: #{tpu_custom_call.1} parent=5 // pred_fallthru
        _
      %p238 = scmp.le.s32.totalorder 1, %s16
      %p239 = scmp.lt.s32.totalorder %s16, 4
      %p240 = pnand %p238, %p239
      %p241 = pneg %p240
      // Predicated region
      $region29: #{tpu_custom_call.1} parent=5 // pred_check
        _
      $region30: #{tpu_custom_call.1} parent=5 // pred_check_branch
        %243 = sbr.rel (%p240) target = $region32
      $region31: #{tpu_custom_call.1} parent=5 // pred_region
        %s244 = ssub.s32 %s16, 1
        // Predicated region
        $region33: #{tpu_custom_call.1} parent=31 // pred_check
          %p245 = pneg %p70
        $region34: #{tpu_custom_call.1} parent=31 // pred_check_branch
          %247 = sbr.rel (%p245) target = $region36
        $region35: #{tpu_custom_call.1} parent=31 // pred_region
          %249 = dma.done [#allocation4], 256
        $region36: #{tpu_custom_call.1} parent=31 // pred_fallthru
          _
        %s250 = sand.u32 %s21, 1
        %s251 = scalar_lea.sflag [#allocation7], %s250
        %s252 = sand.u32 %s87, 1
        %s253 = smul.addr %s252, 16
        %s254 = scalar_lea.vmem [#allocation6], %s253
        // Predicated region
        $region37: #{tpu_custom_call.1} parent=31 // pred_check
          %p255 = pneg %p100
        $region38: #{tpu_custom_call.1} parent=31 // pred_check_branch
          %257 = sbr.rel (%p255) target = $region40
        $region39: #{tpu_custom_call.1} parent=31 // pred_region
          %259 = dma.done %s251, 256
        $region40: #{tpu_custom_call.1} parent=31 // pred_fallthru
          _
        %s260 = sand.u32 %s21, 1
        %s261 = scalar_lea.sflag [#allocation7], %s260
        %s262 = sand.u32 %s115, 1
        %s263 = scalar_lea.vmem [#allocation8], %s262
        // Predicated region
        $region41: #{tpu_custom_call.1} parent=31 // pred_check
          %p264 = pneg %p128
        $region42: #{tpu_custom_call.1} parent=31 // pred_check_branch
          %266 = sbr.rel (%p264) target = $region44
        $region43: #{tpu_custom_call.1} parent=31 // pred_region
          %268 = dma.done %s261, 16
        $region44: #{tpu_custom_call.1} parent=31 // pred_fallthru
          _
        %p269 = pneg %p70
        %p270 = pneg %p67
        %s271 = sand.u32 %s21, 1
        %s272 = scalar_lea.sflag [#allocation7], %s271
        %s273 = sand.u32 %s87, 1
        %s274 = smul.addr %s273, 16
        %s275 = scalar_lea.vmem [#allocation6], %s274
        %p276 = pneg %p100
        %p277 = pneg %p97
        %s278 = sand.u32 %s21, 1
        %s279 = scalar_lea.sflag [#allocation7], %s278
        %s280 = sand.u32 %s115, 1
        %s281 = scalar_lea.vmem [#allocation8], %s280
        %p282 = pneg %p128
        %p283 = pneg %p125
        %p284 = pneg %p158
        %p285 = pneg %p155
        %s286 = sand.u32 %s145, 1
        %s287 = scalar_lea.sflag [#allocation5], %s286
        %s288 = sand.u32 %s145, 1
        %s289 = smul.addr %s288, 8
        %s290 = scalar_lea.vmem [#allocation9], %s289
        %s291 = smul.u32 2, %s27
        %s292 = smul.u32 4, %s30
        %s293 = smul.u32 2, %s27
        %p295 = scmp.eq.s32.totalorder %s30, 0
        // Predicated region
        $region45: #{tpu_custom_call.1} parent=31 // pred_check
          %p296 = pneg %p295
        $region46: #{tpu_custom_call.1} parent=31 // pred_check_branch
          %298 = sbr.rel (%p296) target = $region48
        $region47: #{tpu_custom_call.1} parent=31 // pred_region
          %vm299 = vcmask 261120
          %300 = vst.msk [vmem:[#allocation2] sm:$0xff] %vm299, 0.0
          %301 = vst.msk [vmem:[#allocation2 + $0x8] sm:$0xff] %vm299, 0.0
        $region48: #{tpu_custom_call.1} parent=31 // pred_fallthru
          _
        %v302 = vld [vmem:[#allocation2] sm:$0xff]
        %v303 = vld [vmem:[#allocation2 + $0x8] sm:$0xff]
        %v304 = vld [vmem:[#allocation3] sm:$0xff]
        %v305 = vld [vmem:[#allocation3 + $0x8] sm:$0xff]
        %v306 = vpack.c.bf16 %v305, %v304
        %v307 = vld [vmem:[%s254] sm:$0xf]
        %v308 = vld [vmem:[%s254 + $0x4] sm:$0xf]
        %v309 = vld [vmem:[%s254 + $0x8] sm:$0xf]
        %v310 = vld [vmem:[%s254 + $0xc] sm:$0xf]
        %v315 = vunpack.c.l.b16 %v307
        %v316 = vunpack.c.l.b16 %v308
        %v317 = vunpack.c.l.b16 %v309
        %v318 = vunpack.c.l.b16 %v310
        %v319 = vpack.c.b16 %v316, %v315
        %v320 = vpack.c.b16 %v318, %v317
        %vm323 = vcmask 261120
        %v325 = vsel %vm323, %v306, 0
        %327 = vmatpush.bf16.msra.mxu0 0
        %328 = vmatpush.bf16.msra.mxu0 0
        %329 = vmatpush.bf16.msra.mxu0 0
        %330 = vmatpush.bf16.msra.mxu0 0
        %331 = vmatpush.bf16.msra.mxu0 0
        %332 = vmatpush.bf16.msra.mxu0 0
        %333 = vmatpush.bf16.msra.mxu0 %v320
        %334 = vmatpush.bf16.msra.mxu0 %v319
        %335 = vmatmul.bf16.gmra.mxu0 %v325
        %v336 = vpop.f32.mrf.mxu0
        %v337 = vadd.f32 0.0, %v336
        %v338 = vpop.f32.mrf.mxu0
        %v339 = vadd.f32 0.0, %v338
        %340 = vdwg.mxu0
        %v341 = vadd.f32 %v302, %v337
        %v342 = vadd.f32 %v303, %v339
        %343 = vst.msk [vmem:[#allocation2] sm:$0xff] %vm323, %v341
        %344 = vst.msk [vmem:[#allocation2 + $0x8] sm:$0xff] %vm323, %v342
        // Predicated region
        $region49: #{tpu_custom_call.1} parent=31 // pred_check
          %p345 = pneg %p295
        $region50: #{tpu_custom_call.1} parent=31 // pred_check_branch
          %347 = sbr.rel (%p345) target = $region52
        $region51: #{tpu_custom_call.1} parent=31 // pred_region
          %v348 = vld [vmem:[#allocation2] sm:$0xff]
          %v349 = vld [vmem:[#allocation2 + $0x8] sm:$0xff]
          %v350 = vld [vmem:[%s263] sm:$0x1]
          %v352 = vperm.slane %v350, 0
          %v354 = vadd.f32 %v348, %v352
          %v355 = vadd.f32 %v349, %v352
          %v356 = vpack.c.bf16 %v354, %v354
          %v357 = vpack.c.bf16 %v355, %v355
          %vm358 = vcmask 257024
          %359 = vst.msk [vmem:[%s290] sm:$0xf] %vm358, %v356
          %360 = vst.msk [vmem:[%s290 + $0x4] sm:$0xf] %vm358, %v357
        $region52: #{tpu_custom_call.1} parent=31 // pred_fallthru
          _
        %s361 = sand.u32 %s145, 1
        %s362 = scalar_lea.sflag [#allocation5], %s361
        %s363 = sand.u32 %s145, 1
        %s364 = smul.addr %s363, 8
        %s365 = scalar_lea.vmem [#allocation9], %s364
        // Predicated region
        $region53: #{tpu_custom_call.1} parent=31 // pred_check
          %p366 = pneg %p155
        $region54: #{tpu_custom_call.1} parent=31 // pred_check_branch
          %368 = sbr.rel (%p366) target = $region56
        $region55: #{tpu_custom_call.1} parent=31 // pred_region
          %s369 = smul.u32 2, %s27
          %371 = vsyncadd %s362, 0
          %s372 = sadd.s32 %s28, %s369
          %s373 = smul.addr %s29, 2
          %s374 = sadd.s32 %s372, %s373
          %s375 = smul.addr %s374, 4
          %s376 = scalar_lea.hbm %s3, %s375
          %s377 = sshll.u32 %s365, 4
          %s378 = int_to_ptr.vmem [resolvable:$true] %s377
          %s379 = sshll.u32 %s376, 4
          %s380 = int_to_ptr.hbm [resolvable:$true] %s379
          %385 = dma.vmem_to_hbm [thread:$0]  %s378, 128, %s380, %s362, 64, 64, 4
        $region56: #{tpu_custom_call.1} parent=31 // pred_fallthru
          _
      $region32: #{tpu_custom_call.1} parent=5 // pred_fallthru
        _
      %p386 = scmp.le.s32.totalorder 2, %s16
      // Predicated region
      $region57: #{tpu_custom_call.1} parent=5 // pred_check
        %p387 = pneg %p386
      $region58: #{tpu_custom_call.1} parent=5 // pred_check_branch
        %389 = sbr.rel (%p387) target = $region60
      $region59: #{tpu_custom_call.1} parent=5 // pred_region
        %s390 = ssub.s32 %s16, 2
        // Predicated region
        $region61: #{tpu_custom_call.1} parent=59 // pred_check
          %p391 = pneg %p161
        $region62: #{tpu_custom_call.1} parent=59 // pred_check_branch
          %393 = sbr.rel (%p391) target = $region64
        $region63: #{tpu_custom_call.1} parent=59 // pred_region
          %s394 = sand.u32 %s146, 1
          %s395 = scalar_lea.sflag [#allocation5], %s394
          %s396 = sand.u32 %s146, 1
          %s397 = smul.addr %s396, 8
          %s398 = scalar_lea.vmem [#allocation9], %s397
          %400 = dma.done %s395, 128
        $region64: #{tpu_custom_call.1} parent=59 // pred_fallthru
          _
      $region60: #{tpu_custom_call.1} parent=5 // pred_fallthru
        _
    $region6: #{tpu_custom_call.1} parent=1 // loop_footer
      %s20 = sadd.s32 1, %s16
    $region7: #{tpu_custom_call.1} parent=1 // loop_footer_branch
      %15 = sbr.rel target = $region3
    $region8: #{tpu_custom_call.1} parent=1 // loop_exit
      _
    %401 = vsyncpa [#allocation4], 1
    %s402 = scalar_lea.sflag [#allocation4], 1
    %403 = vsyncpa %s402, 1
    %404 = vsyncpa [#allocation7], 1
    %s405 = scalar_lea.sflag [#allocation7], 1
    %406 = vsyncpa %s405, 1
    %407 = vsyncpa [#allocation5], 1
    %s408 = scalar_lea.sflag [#allocation5], 1
    %409 = vsyncpa %s408, 1

</llo_original>
